<compile_context>
chip_gen: v7x
topology: tpu7x:2x2x1
jax: 0.10.0
libtpu: 0.0.40
codegen_flags: <defaults>
</compile_context>

<pallas_src>
import functools

import jax
import jax.numpy as jnp
from jax.experimental import pallas as pl
from jax.experimental.pallas import tpu as pltpu


def _round_up(x, m):
    return ((x + m - 1) // m) * m


def _atrous_bn_relu_kernel(mask_ref, x_ref, w_ref, gamma_ref, beta_ref,
                           o_ref, cols_scr, s1_ref, s2_ref, *,
                           kh_size, kw_size, dilation, stride, wp, span,
                           cig, cig_pad, cog, groups, inv_count, eps):
    # mask_ref  : (1, Ho*Wp)   f32   1.0 for valid output columns, 0.0 for junk
    # x_ref     : (1, Cin, FLAT) bf16  zero-padded, spatially-flattened input
    # w_ref     : (Cout, KH*KW*cig_pad) bf16  tap-flattened weights (zero pad rows)
    # gamma/beta: (Cout, 1)    f32
    # o_ref     : (N, Cout, Ho*Wp) f32  resident output block (wide layout)
    # cols_scr  : (KH*KW*cig_pad, Ho*Wp) bf16  im2col matrix (one group at a time)
    # s1/s2     : (Cout, 1)    f32   running sum / sum of squares (valid cols)
    i = pl.program_id(0)

    @pl.when(i == 0)
    def _init():
        cols_scr[...] = jnp.zeros_like(cols_scr)   # zeros the sublane pad rows
        s1_ref[...] = jnp.zeros_like(s1_ref)
        s2_ref[...] = jnp.zeros_like(s2_ref)

    # ---- im2col + ONE fused MXU matmul per group ----------------------------
    # For tap (kh, kw), flattened output index p = ho*Wp + wo needs
    # xflat[:, off + p*stride] with off = kh*dil*Wp + kw*dil (contiguous window
    # for stride == 1).  Columns with wo >= Wo are junk and masked/stripped
    # later; reads past Hp*Wp land in the zero tail padded by the wrapper.
    ys = []
    for g in range(groups):
        for kh in range(kh_size):
            for kw in range(kw_size):
                t = kh * kw_size + kw
                off = kh * dilation * wp + kw * dilation
                if stride == 1:
                    sl = slice(off, off + span)
                else:
                    sl = slice(off, off + (span - 1) * stride + 1, stride)
                cols_scr[t * cig_pad:t * cig_pad + cig, :] = \
                    x_ref[0, g * cig:(g + 1) * cig, sl]
        # (Cog, Kpad) @ (Kpad, Ho*Wp) -> f32 accumulation on the MXU.
        ys.append(jnp.dot(w_ref[g * cog:(g + 1) * cog, :], cols_scr[...],
                          preferred_element_type=jnp.float32))
    y = ys[0] if groups == 1 else jnp.concatenate(ys, axis=0)  # (Cout, Ho*Wp)

    # Raw conv result for this batch element stays resident in VMEM.
    o_ref[i] = y

    # ---- BatchNorm partial statistics over valid columns only ---------------
    ym = y * mask_ref[...]
    s1_ref[...] += jnp.sum(ym, axis=1, keepdims=True)
    s2_ref[...] += jnp.sum(ym * y, axis=1, keepdims=True)

    # ---- last step: fold stats -> scale/shift, normalize + ReLU in place ----
    @pl.when(i == pl.num_programs(0) - 1)
    def _finalize():
        mean = s1_ref[...] * inv_count                         # (Cout, 1)
        var = jnp.maximum(s2_ref[...] * inv_count - mean * mean, 0.0)
        inv_std = jax.lax.rsqrt(var + eps)
        scale = gamma_ref[...] * inv_std                       # (Cout, 1)
        shift = beta_ref[...] - mean * scale
        o_ref[...] = jnp.maximum(o_ref[...] * scale + shift, 0.0)


def atrous_block_forward(x, weight, gamma, beta, *, kernel_size, padding,
                         stride, dilation, groups, eps=1e-5,
                         mxu_dtype=jnp.bfloat16):
    """Forward of atrous_block. x: (N, Cin, H, W) NCHW, like PyTorch."""
    n, cin, h, w = x.shape
    cout = weight.shape[0]
    kh = kw = kernel_size
    cig = cin // groups
    cog = cout // groups
    hp, wp = h + 2 * padding, w + 2 * padding
    h_out = (h + 2 * padding - dilation * (kh - 1) - 1) // stride + 1
    w_out = (w + 2 * padding - dilation * (kw - 1) - 1) // stride + 1
    span = h_out * wp                        # "wide" flattened spatial (junk cols)
    off_max = (kh - 1) * dilation * wp + (kw - 1) * dilation
    flat = _round_up(max(hp * wp, off_max + (span - 1) * stride + 1), 128)
    cig_pad = _round_up(cig, 8)              # sublane-aligned tap row bands
    kdim = kh * kw * cig_pad

    # Zero-pad + flatten + bf16-cast the input ONCE in HBM (fused XLA op).
    xp = jnp.pad(x, ((0, 0), (0, 0), (padding, padding), (padding, padding)))
    xp = xp.reshape(n, cin, hp * wp)
    xp = jnp.pad(xp, ((0, 0), (0, 0), (0, flat - hp * wp))).astype(mxu_dtype)

    # (Cout, Cig, KH, KW) -> (Cout, KH*KW, Cig) -> zero-pad Cig -> (Cout, kdim), bf16.
    w_t = jnp.transpose(weight, (0, 2, 3, 1)).reshape(cout, kh * kw, cig)
    w_t = jnp.pad(w_t, ((0, 0), (0, 0), (0, cig_pad - cig)))
    w2 = w_t.reshape(cout, kdim).astype(mxu_dtype)

    # Validity lane mask for the wide spatial layout (wo < Wo within each row).
    mask = ((jnp.arange(span) % wp) < w_out).astype(jnp.float32).reshape(1, span)
    gamma2 = gamma.reshape(cout, 1).astype(jnp.float32)
    beta2 = beta.reshape(cout, 1).astype(jnp.float32)

    kernel = functools.partial(
        _atrous_bn_relu_kernel, kh_size=kh, kw_size=kw, dilation=dilation,
        stride=stride, wp=wp, span=span, cig=cig, cig_pad=cig_pad, cog=cog,
        groups=groups, inv_count=1.0 / float(n * h_out * w_out), eps=float(eps))

    y_wide = pl.pallas_call(
        kernel,
        grid=(n,),
        out_shape=jax.ShapeDtypeStruct((n, cout, span), jnp.float32),
        in_specs=[pl.BlockSpec((1, span), lambda i: (0, 0)),          # mask
                  pl.BlockSpec((1, cin, flat), lambda i: (i, 0, 0)),  # x (lane-dense)
                  pl.BlockSpec((cout, kdim), lambda i: (0, 0)),       # weights
                  pl.BlockSpec((cout, 1), lambda i: (0, 0)),          # gamma
                  pl.BlockSpec((cout, 1), lambda i: (0, 0))],         # beta
        # Whole output resident across the batch grid (accumulator pattern):
        out_specs=pl.BlockSpec((n, cout, span), lambda i: (0, 0, 0)),
        scratch_shapes=[pltpu.VMEM((kdim, span), mxu_dtype),          # im2col (bf16)
                        pltpu.VMEM((cout, 1), jnp.float32),           # sum
                        pltpu.VMEM((cout, 1), jnp.float32)],          # sum of squares
        compiler_params=pltpu.CompilerParams(
            # Sequential batch axis: BN stats accumulate across steps and the
            # last step normalizes the whole resident output in place.
            dimension_semantics=("arbitrary",),
            vmem_limit_bytes=32 * 1024 * 1024),
    )(mask, xp, w2, gamma2, beta2)

    # Strip junk columns (wo >= Wo) + back to NCHW: one fused XLA slice/reshape.
    out = y_wide.reshape(n, cout, h_out, wp)[:, :, :, :w_out]
    return out.astype(x.dtype)


def _reference(x, weight, gamma, beta, *, padding, stride, dilation, groups,
               eps=1e-5):
    """Pure-JAX f32 reference: Conv2d -> training-mode BatchNorm2d -> ReLU."""
    y = jax.lax.conv_general_dilated(
        x, weight, window_strides=(stride, stride),
        padding=((padding, padding), (padding, padding)),
        rhs_dilation=(dilation, dilation),
        dimension_numbers=('NCHW', 'OIHW', 'NCHW'),
        feature_group_count=groups,
        precision=jax.lax.Precision.HIGHEST)
    mean = jnp.mean(y, axis=(0, 2, 3), keepdims=True)
    var = jnp.mean((y - mean) ** 2, axis=(0, 2, 3), keepdims=True)
    yn = ((y - mean) * jax.lax.rsqrt(var + eps) * gamma.reshape(1, -1, 1, 1)
          + beta.reshape(1, -1, 1, 1))
    return jnp.maximum(yn, 0.0)


if __name__ == "__main__":
    # Module hyper-parameters (atrous => dilation > 1)
    IN_CH, OUT_CH = 4, 8
    KERNEL, PADDING, STRIDE, GROUP, DILATION = 3, 2, 1, 1, 2
    N, H, W = 2, 16, 16

    key = jax.random.PRNGKey(0)
    k_x, k_w, k_g, k_b = jax.random.split(key, 4)

    x = jax.random.normal(k_x, (N, IN_CH, H, W), dtype=jnp.float32)
    fan_in = (IN_CH // GROUP) * KERNEL * KERNEL
    bound = 1.0 / (fan_in ** 0.5)
    weight = jax.random.uniform(
        k_w, (OUT_CH, IN_CH // GROUP, KERNEL, KERNEL),
        minval=-bound, maxval=bound, dtype=jnp.float32)
    gamma = 1.0 + 0.1 * jax.random.normal(k_g, (OUT_CH,), dtype=jnp.float32)
    beta = 0.1 * jax.random.normal(k_b, (OUT_CH,), dtype=jnp.float32)

    fwd = jax.jit(functools.partial(
        atrous_block_forward, kernel_size=KERNEL, padding=PADDING,
        stride=STRIDE, dilation=DILATION, groups=GROUP))
    out = jax.block_until_ready(fwd(x, weight, gamma, beta))

    assert out.shape == (N, OUT_CH, H, W), out.shape
    assert bool(jnp.all(out >= 0.0))               # ReLU post-condition
    assert bool(jnp.all(jnp.isfinite(out)))

    # Correctness vs. f32 reference (MXU operands are bf16 -> loose tolerance).
    ref = _reference(x, weight, gamma, beta, padding=PADDING, stride=STRIDE,
                     dilation=DILATION, groups=GROUP)
    err = float(jnp.max(jnp.abs(out - ref)))
    assert err < 5e-2, f"max abs err vs reference: {err}"

    print("KERNEL_OK")
</pallas_src>

<mosaic_0001>
module attributes {stable_mosaic.version = 11 : i64} {
  func.func @_atrous_bn_relu_kernel(%arg0: i32, %arg1: memref<1x320xf32, #tpu.memory_space<vmem>>, %arg2: memref<1x4x512xbf16, #tpu.memory_space<vmem>>, %arg3: memref<8x72xbf16, #tpu.memory_space<vmem>>, %arg4: memref<8x1xf32, #tpu.memory_space<vmem>>, %arg5: memref<8x1xf32, #tpu.memory_space<vmem>>, %arg6: memref<2x8x320xf32, #tpu.memory_space<vmem>>, %arg7: memref<72x320xbf16, #tpu.memory_space<vmem>>, %arg8: memref<8x1xf32, #tpu.memory_space<vmem>>, %arg9: memref<8x1xf32, #tpu.memory_space<vmem>>) attributes {dimension_semantics = [#tpu.dimension_semantics<arbitrary>], iteration_bounds = array<i64: 2>, scalar_prefetch = 0 : i64, scratch_operands = 3 : i64, tpu.core_type = #tpu.core_type<tc>, window_params = [{pipeline_mode = #tpu.pipeline_mode<synchronous>, transform_indices = @transform_0, window_bounds = array<i64: 1, 320>}, {transform_indices = @transform_1, window_bounds = array<i64: 1, 4, 512>}, {pipeline_mode = #tpu.pipeline_mode<synchronous>, transform_indices = @transform_2, window_bounds = array<i64: 8, 72>}, {pipeline_mode = #tpu.pipeline_mode<synchronous>, transform_indices = @transform_3, window_bounds = array<i64: 8, 1>}, {pipeline_mode = #tpu.pipeline_mode<synchronous>, transform_indices = @transform_4, window_bounds = array<i64: 8, 1>}, {pipeline_mode = #tpu.pipeline_mode<synchronous>, transform_indices = @transform_5, window_bounds = array<i64: 2, 8, 320>}]} {
    %c0_i32 = arith.constant 0 : i32
    %0 = arith.cmpi eq, %arg0, %c0_i32 : i32
    %1 = arith.extui %0 : i1 to i32
    %c0_i32_0 = arith.constant 0 : i32
    %2 = arith.cmpi ne, %1, %c0_i32_0 : i32
    scf.if %2 {
      %cst_49 = arith.constant 0.000000e+00 : bf16
      %54 = vector.broadcast %cst_49 : bf16 to vector<72x320xbf16>
      %c0_50 = arith.constant 0 : index
      %c0_51 = arith.constant 0 : index
      %55 = vector.load %arg7[%c0_50, %c0_51] : memref<72x320xbf16, #tpu.memory_space<vmem>>, vector<72x320xbf16>
      tpu.vector_store %arg7[%c0_50, %c0_51], %54 {strides = array<i32>} : memref<72x320xbf16, #tpu.memory_space<vmem>>, vector<72x320xbf16>,
      %cst_52 = arith.constant 0.000000e+00 : f32
      %56 = vector.broadcast %cst_52 : f32 to vector<8x1xf32>
      %c0_53 = arith.constant 0 : index
      %c0_54 = arith.constant 0 : index
      %57 = vector.load %arg8[%c0_53, %c0_54] : memref<8x1xf32, #tpu.memory_space<vmem>>, vector<8x1xf32>
      tpu.vector_store %arg8[%c0_53, %c0_54], %56 {strides = array<i32>} : memref<8x1xf32, #tpu.memory_space<vmem>>, vector<8x1xf32>,
      %cst_55 = arith.constant 0.000000e+00 : f32
      %58 = vector.broadcast %cst_55 : f32 to vector<8x1xf32>
      %c0_56 = arith.constant 0 : index
      %c0_57 = arith.constant 0 : index
      %59 = vector.load %arg9[%c0_56, %c0_57] : memref<8x1xf32, #tpu.memory_space<vmem>>, vector<8x1xf32>
      tpu.vector_store %arg9[%c0_56, %c0_57], %58 {strides = array<i32>} : memref<8x1xf32, #tpu.memory_space<vmem>>, vector<8x1xf32>,
    } else {
    }
    %c0 = arith.constant 0 : index
    %c0_1 = arith.constant 0 : index
    %c0_2 = arith.constant 0 : index
    %3 = vector.load %arg2[%c0, %c0_1, %c0_2] : memref<1x4x512xbf16, #tpu.memory_space<vmem>>, vector<1x4x320xbf16>
    %4 = vector.shape_cast %3 : vector<1x4x320xbf16> to vector<4x320xbf16>
    %c0_3 = arith.constant 0 : index
    %c0_4 = arith.constant 0 : index
    %5 = vector.load %arg7[%c0_3, %c0_4] : memref<72x320xbf16, #tpu.memory_space<vmem>>, vector<4x320xbf16>
    tpu.vector_store %arg7[%c0_3, %c0_4], %4 {strides = array<i32>} : memref<72x320xbf16, #tpu.memory_space<vmem>>, vector<4x320xbf16>,
    %c0_5 = arith.constant 0 : index
    %c0_6 = arith.constant 0 : index
    %c2 = arith.constant 2 : index
    %6 = vector.load %arg2[%c0_5, %c0_6, %c2] : memref<1x4x512xbf16, #tpu.memory_space<vmem>>, vector<1x4x320xbf16>
    %7 = vector.shape_cast %6 : vector<1x4x320xbf16> to vector<4x320xbf16>
    %c8 = arith.constant 8 : index
    %c0_7 = arith.constant 0 : index
    %8 = vector.load %arg7[%c8, %c0_7] : memref<72x320xbf16, #tpu.memory_space<vmem>>, vector<4x320xbf16>
    tpu.vector_store %arg7[%c8, %c0_7], %7 {strides = array<i32>} : memref<72x320xbf16, #tpu.memory_space<vmem>>, vector<4x320xbf16>,
    %c0_8 = arith.constant 0 : index
    %c0_9 = arith.constant 0 : index
    %c4 = arith.constant 4 : index
    %9 = vector.load %arg2[%c0_8, %c0_9, %c4] : memref<1x4x512xbf16, #tpu.memory_space<vmem>>, vector<1x4x320xbf16>
    %10 = vector.shape_cast %9 : vector<1x4x320xbf16> to vector<4x320xbf16>
    %c16 = arith.constant 16 : index
    %c0_10 = arith.constant 0 : index
    %11 = vector.load %arg7[%c16, %c0_10] : memref<72x320xbf16, #tpu.memory_space<vmem>>, vector<4x320xbf16>
    tpu.vector_store %arg7[%c16, %c0_10], %10 {strides = array<i32>} : memref<72x320xbf16, #tpu.memory_space<vmem>>, vector<4x320xbf16>,
    %c0_11 = arith.constant 0 : index
    %c0_12 = arith.constant 0 : index
    %c40 = arith.constant 40 : index
    %12 = vector.load %arg2[%c0_11, %c0_12, %c40] : memref<1x4x512xbf16, #tpu.memory_space<vmem>>, vector<1x4x320xbf16>
    %13 = vector.shape_cast %12 : vector<1x4x320xbf16> to vector<4x320xbf16>
    %c24 = arith.constant 24 : index
    %c0_13 = arith.constant 0 : index
    %14 = vector.load %arg7[%c24, %c0_13] : memref<72x320xbf16, #tpu.memory_space<vmem>>, vector<4x320xbf16>
    tpu.vector_store %arg7[%c24, %c0_13], %13 {strides = array<i32>} : memref<72x320xbf16, #tpu.memory_space<vmem>>, vector<4x320xbf16>,
    %c0_14 = arith.constant 0 : index
    %c0_15 = arith.constant 0 : index
    %c42 = arith.constant 42 : index
    %15 = vector.load %arg2[%c0_14, %c0_15, %c42] : memref<1x4x512xbf16, #tpu.memory_space<vmem>>, vector<1x4x320xbf16>
    %16 = vector.shape_cast %15 : vector<1x4x320xbf16> to vector<4x320xbf16>
    %c32 = arith.constant 32 : index
    %c0_16 = arith.constant 0 : index
    %17 = vector.load %arg7[%c32, %c0_16] : memref<72x320xbf16, #tpu.memory_space<vmem>>, vector<4x320xbf16>
    tpu.vector_store %arg7[%c32, %c0_16], %16 {strides = array<i32>} : memref<72x320xbf16, #tpu.memory_space<vmem>>, vector<4x320xbf16>,
    %c0_17 = arith.constant 0 : index
    %c0_18 = arith.constant 0 : index
    %c44 = arith.constant 44 : index
    %18 = vector.load %arg2[%c0_17, %c0_18, %c44] : memref<1x4x512xbf16, #tpu.memory_space<vmem>>, vector<1x4x320xbf16>
    %19 = vector.shape_cast %18 : vector<1x4x320xbf16> to vector<4x320xbf16>
    %c40_19 = arith.constant 40 : index
    %c0_20 = arith.constant 0 : index
    %20 = vector.load %arg7[%c40_19, %c0_20] : memref<72x320xbf16, #tpu.memory_space<vmem>>, vector<4x320xbf16>
    tpu.vector_store %arg7[%c40_19, %c0_20], %19 {strides = array<i32>} : memref<72x320xbf16, #tpu.memory_space<vmem>>, vector<4x320xbf16>,
    %c0_21 = arith.constant 0 : index
    %c0_22 = arith.constant 0 : index
    %c80 = arith.constant 80 : index
    %21 = vector.load %arg2[%c0_21, %c0_22, %c80] : memref<1x4x512xbf16, #tpu.memory_space<vmem>>, vector<1x4x320xbf16>
    %22 = vector.shape_cast %21 : vector<1x4x320xbf16> to vector<4x320xbf16>
    %c48 = arith.constant 48 : index
    %c0_23 = arith.constant 0 : index
    %23 = vector.load %arg7[%c48, %c0_23] : memref<72x320xbf16, #tpu.memory_space<vmem>>, vector<4x320xbf16>
    tpu.vector_store %arg7[%c48, %c0_23], %22 {strides = array<i32>} : memref<72x320xbf16, #tpu.memory_space<vmem>>, vector<4x320xbf16>,
    %c0_24 = arith.constant 0 : index
    %c0_25 = arith.constant 0 : index
    %c82 = arith.constant 82 : index
    %24 = vector.load %arg2[%c0_24, %c0_25, %c82] : memref<1x4x512xbf16, #tpu.memory_space<vmem>>, vector<1x4x320xbf16>
    %25 = vector.shape_cast %24 : vector<1x4x320xbf16> to vector<4x320xbf16>
    %c56 = arith.constant 56 : index
    %c0_26 = arith.constant 0 : index
    %26 = vector.load %arg7[%c56, %c0_26] : memref<72x320xbf16, #tpu.memory_space<vmem>>, vector<4x320xbf16>
    tpu.vector_store %arg7[%c56, %c0_26], %25 {strides = array<i32>} : memref<72x320xbf16, #tpu.memory_space<vmem>>, vector<4x320xbf16>,
    %c0_27 = arith.constant 0 : index
    %c0_28 = arith.constant 0 : index
    %c84 = arith.constant 84 : index
    %27 = vector.load %arg2[%c0_27, %c0_28, %c84] : memref<1x4x512xbf16, #tpu.memory_space<vmem>>, vector<1x4x320xbf16>
    %28 = vector.shape_cast %27 : vector<1x4x320xbf16> to vector<4x320xbf16>
    %c64 = arith.constant 64 : index
    %c0_29 = arith.constant 0 : index
    %29 = vector.load %arg7[%c64, %c0_29] : memref<72x320xbf16, #tpu.memory_space<vmem>>, vector<4x320xbf16>
    tpu.vector_store %arg7[%c64, %c0_29], %28 {strides = array<i32>} : memref<72x320xbf16, #tpu.memory_space<vmem>>, vector<4x320xbf16>,
    %c0_30 = arith.constant 0 : index
    %c0_31 = arith.constant 0 : index
    %30 = vector.load %arg3[%c0_30, %c0_31] : memref<8x72xbf16, #tpu.memory_space<vmem>>, vector<8x72xbf16>
    %c0_32 = arith.constant 0 : index
    %c0_33 = arith.constant 0 : index
    %31 = vector.load %arg7[%c0_32, %c0_33] : memref<72x320xbf16, #tpu.memory_space<vmem>>, vector<72x320xbf16>
    %cst = arith.constant dense<0.000000e+00> : vector<8x320xf32>
    %32 = tpu.matmul %30, %31, %cst {dimension_numbers = #tpu.dot_dimension_numbers<[1], [0], [0], [1], [0, 0, 1, 1], [], []>} : vector<8x72xbf16>, vector<72x320xbf16>, vector<8x320xf32> -> vector<8x320xf32>
    %33 = arith.index_cast %arg0 : i32 to index
    %c0_34 = arith.constant 0 : index
    %c0_35 = arith.constant 0 : index
    %34 = vector.load %arg6[%33, %c0_34, %c0_35] : memref<2x8x320xf32, #tpu.memory_space<vmem>>, vector<1x8x320xf32>
    %35 = vector.shape_cast %34 : vector<1x8x320xf32> to vector<8x320xf32>
    %36 = vector.shape_cast %32 : vector<8x320xf32> to vector<1x8x320xf32>
    tpu.vector_store %arg6[%33, %c0_34, %c0_35], %36 {strides = array<i32>} : memref<2x8x320xf32, #tpu.memory_space<vmem>>, vector<1x8x320xf32>,
    %c0_36 = arith.constant 0 : index
    %c0_37 = arith.constant 0 : index
    %37 = vector.load %arg1[%c0_36, %c0_37] : memref<1x320xf32, #tpu.memory_space<vmem>>, vector<1x320xf32>
    %38 = vector.broadcast %37 : vector<1x320xf32> to vector<8x320xf32>
    %39 = arith.mulf %32, %38 : vector<8x320xf32>
    %c0_38 = arith.constant 0 : index
    %c0_39 = arith.constant 0 : index
    %40 = vector.load %arg8[%c0_38, %c0_39] : memref<8x1xf32, #tpu.memory_space<vmem>>, vector<8x1xf32>
    %cst_40 = arith.constant dense<0.000000e+00> : vector<8xf32>
    %41 = vector.multi_reduction <add>, %39, %cst_40 [1] : vector<8x320xf32> to vector<8xf32>
    %42 = vector.shape_cast %41 : vector<8xf32> to vector<8x1xf32>
    %43 = arith.addf %40, %42 : vector<8x1xf32>
    %c0_41 = arith.constant 0 : index
    %c0_42 = arith.constant 0 : index
    %44 = vector.load %arg8[%c0_41, %c0_42] : memref<8x1xf32, #tpu.memory_space<vmem>>, vector<8x1xf32>
    tpu.vector_store %arg8[%c0_41, %c0_42], %43 {strides = array<i32>} : memref<8x1xf32, #tpu.memory_space<vmem>>, vector<8x1xf32>,
    %c0_43 = arith.constant 0 : index
    %c0_44 = arith.constant 0 : index
    %45 = vector.load %arg9[%c0_43, %c0_44] : memref<8x1xf32, #tpu.memory_space<vmem>>, vector<8x1xf32>
    %46 = arith.mulf %39, %32 : vector<8x320xf32>
    %cst_45 = arith.constant dense<0.000000e+00> : vector<8xf32>
    %47 = vector.multi_reduction <add>, %46, %cst_45 [1] : vector<8x320xf32> to vector<8xf32>
    %48 = vector.shape_cast %47 : vector<8xf32> to vector<8x1xf32>
    %49 = arith.addf %45, %48 : vector<8x1xf32>
    %c0_46 = arith.constant 0 : index
    %c0_47 = arith.constant 0 : index
    %50 = vector.load %arg9[%c0_46, %c0_47] : memref<8x1xf32, #tpu.memory_space<vmem>>, vector<8x1xf32>
    tpu.vector_store %arg9[%c0_46, %c0_47], %49 {strides = array<i32>} : memref<8x1xf32, #tpu.memory_space<vmem>>, vector<8x1xf32>,
    %c1_i32 = arith.constant 1 : i32
    %51 = arith.cmpi eq, %arg0, %c1_i32 : i32
    %52 = arith.extui %51 : i1 to i32
    %c0_i32_48 = arith.constant 0 : i32
    %53 = arith.cmpi ne, %52, %c0_i32_48 : i32
    scf.if %53 {
      %c0_49 = arith.constant 0 : index
      %c0_50 = arith.constant 0 : index
      %54 = vector.load %arg8[%c0_49, %c0_50] : memref<8x1xf32, #tpu.memory_space<vmem>>, vector<8x1xf32>
      %cst_51 = arith.constant 0.001953125 : f32
      %55 = vector.broadcast %cst_51 : f32 to vector<8x1xf32>
      %56 = arith.mulf %54, %55 : vector<8x1xf32>
      %c0_52 = arith.constant 0 : index
      %c0_53 = arith.constant 0 : index
      %57 = vector.load %arg9[%c0_52, %c0_53] : memref<8x1xf32, #tpu.memory_space<vmem>>, vector<8x1xf32>
      %cst_54 = arith.constant 0.001953125 : f32
      %58 = vector.broadcast %cst_54 : f32 to vector<8x1xf32>
      %59 = arith.mulf %57, %58 : vector<8x1xf32>
      %60 = arith.mulf %56, %56 : vector<8x1xf32>
      %61 = arith.subf %59, %60 : vector<8x1xf32>
      %cst_55 = arith.constant 0.000000e+00 : f32
      %62 = vector.broadcast %cst_55 : f32 to vector<8x1xf32>
      %63 = arith.maximumf %61, %62 : vector<8x1xf32>
      %cst_56 = arith.constant 9.99999974E-6 : f32
      %64 = vector.broadcast %cst_56 : f32 to vector<8x1xf32>
      %65 = arith.addf %63, %64 : vector<8x1xf32>
      %66 = math.rsqrt %65 : vector<8x1xf32>
      %c0_57 = arith.constant 0 : index
      %c0_58 = arith.constant 0 : index
      %67 = vector.load %arg4[%c0_57, %c0_58] : memref<8x1xf32, #tpu.memory_space<vmem>>, vector<8x1xf32>
      %68 = arith.mulf %67, %66 : vector<8x1xf32>
      %c0_59 = arith.constant 0 : index
      %c0_60 = arith.constant 0 : index
      %69 = vector.load %arg5[%c0_59, %c0_60] : memref<8x1xf32, #tpu.memory_space<vmem>>, vector<8x1xf32>
      %70 = arith.mulf %56, %68 : vector<8x1xf32>
      %71 = arith.subf %69, %70 : vector<8x1xf32>
      %c0_61 = arith.constant 0 : index
      %c0_62 = arith.constant 0 : index
      %c0_63 = arith.constant 0 : index
      %72 = vector.load %arg6[%c0_61, %c0_62, %c0_63] : memref<2x8x320xf32, #tpu.memory_space<vmem>>, vector<2x8x320xf32>
      %73 = vector.shape_cast %68 : vector<8x1xf32> to vector<1x8x1xf32>
      %74 = vector.broadcast %73 : vector<1x8x1xf32> to vector<2x8x320xf32>
      %75 = arith.mulf %72, %74 : vector<2x8x320xf32>
      %76 = vector.shape_cast %71 : vector<8x1xf32> to vector<1x8x1xf32>
      %77 = vector.broadcast %76 : vector<1x8x1xf32> to vector<2x8x320xf32>
      %78 = arith.addf %75, %77 : vector<2x8x320xf32>
      %cst_64 = arith.constant 0.000000e+00 : f32
      %79 = vector.broadcast %cst_64 : f32 to vector<2x8x320xf32>
      %80 = arith.maximumf %78, %79 : vector<2x8x320xf32>
      %c0_65 = arith.constant 0 : index
      %c0_66 = arith.constant 0 : index
      %c0_67 = arith.constant 0 : index
      %81 = vector.load %arg6[%c0_65, %c0_66, %c0_67] : memref<2x8x320xf32, #tpu.memory_space<vmem>>, vector<2x8x320xf32>
      tpu.vector_store %arg6[%c0_65, %c0_66, %c0_67], %80 {strides = array<i32>} : memref<2x8x320xf32, #tpu.memory_space<vmem>>, vector<2x8x320xf32>,
    } else {
    }
    return
  }
  func.func @transform_0(%arg0: i32) -> (i32, i32) {
    %c0_i32 = arith.constant 0 : i32
    %c0_i32_0 = arith.constant 0 : i32
    %c0_i32_1 = arith.constant 0 : i32
    return %c0_i32, %c0_i32_0 : i32, i32
  }
  func.func @transform_1(%arg0: i32) -> (i32, i32, i32) {
    %c0_i32 = arith.constant 0 : i32
    %c0_i32_0 = arith.constant 0 : i32
    %c0_i32_1 = arith.constant 0 : i32
    return %arg0, %c0_i32, %c0_i32_0 : i32, i32, i32
  }
  func.func @transform_2(%arg0: i32) -> (i32, i32) {
    %c0_i32 = arith.constant 0 : i32
    %c0_i32_0 = arith.constant 0 : i32
    %c0_i32_1 = arith.constant 0 : i32
    return %c0_i32, %c0_i32_0 : i32, i32
  }
  func.func @transform_3(%arg0: i32) -> (i32, i32) {
    %c0_i32 = arith.constant 0 : i32
    %c0_i32_0 = arith.constant 0 : i32
    %c0_i32_1 = arith.constant 0 : i32
    return %c0_i32, %c0_i32_0 : i32, i32
  }
  func.func @transform_4(%arg0: i32) -> (i32, i32) {
    %c0_i32 = arith.constant 0 : i32
    %c0_i32_0 = arith.constant 0 : i32
    %c0_i32_1 = arith.constant 0 : i32
    return %c0_i32, %c0_i32_0 : i32, i32
  }
  func.func @transform_5(%arg0: i32) -> (i32, i32, i32) {
    %c0_i32 = arith.constant 0 : i32
    %c0_i32_0 = arith.constant 0 : i32
    %c0_i32_1 = arith.constant 0 : i32
    %c0_i32_2 = arith.constant 0 : i32
    return %c0_i32, %c0_i32_0, %c0_i32_1 : i32, i32, i32
  }
}

</mosaic_0001>

<llo_original>
// kernel: atrous_block_forward.1
$region0: #{atrous_block_forward.1}
  #allocation0 [shape = 'u32[]', space=smem, size = 0x4, offset = 0x4, fixed_abs, tag = 'smem constant byte address 0x4 - core index']
  #allocation1 [shape = 'u32[144,128]{1,0:T(1,128)}', space=vmem, size = 0x12000, scoped, tag = 'internal scratch']
  #allocation2 [shape = 'bf16[72,320]{1,0:T(8,128)(2,1)}', space=vmem, size = 0xd800, scoped, tag = 'scratch operand']
  #allocation3 [shape = 'f32[8,1]{1,0:T(8,128)}', space=vmem, size = 0x1000, scoped, tag = 'scratch operand']
  #allocation4 [shape = 'f32[8,1]{1,0:T(8,128)}', space=vmem, size = 0x1000, scoped, tag = 'scratch operand']
  %s0 = inlined_call_operand.vmem [shape: f32[1,320], index: 0, kind: input, shape index: {}]
  %s1 = inlined_call_operand.vmem [shape: bf16[2,4,512], index: 1, kind: input, shape index: {}]
  %s2 = inlined_call_operand.vmem [shape: bf16[8,72], index: 2, kind: input, shape index: {}]
  %s3 = inlined_call_operand.vmem [shape: f32[8,1], index: 3, kind: input, shape index: {}]
  %s4 = inlined_call_operand.vmem [shape: f32[8,1], index: 4, kind: input, shape index: {}]
  %s5 = inlined_call_operand.vmem [shape: f32[2,8,320], index: 5, kind: output, shape index: {}]
  %s6 = sld [smem:[#allocation0]]
  $region61: #{atrous_block_forward.1} parent=0
    _
  %s8 = ssub.s32 1, %s6
  %s9 = scalar_select 0, %s8, %s6
  loop: start=0, step=1, limit=4
  $region2: #{atrous_block_forward.1} parent=0 // loop_pre_header
    _
  $region3: #{atrous_block_forward.1} parent=0 // loop_header
    %s11 = sphi 0, %s15
    %p12 = scmp.ge.s32.totalorder %s11, 4
    %s19 = sphi 0, %s19
    %s21 = sphi 0, %s19
    %s22 = sphi 0, %s21
    %s36 = sphi 0, %s22
    %s42 = sphi 0, %s44
    %s45 = sphi 0, %s42
    %s46 = sphi 0, %s45
    %s62 = sphi 0, %s46
    %s66 = sphi 0, %s66
    %s68 = sphi 0, %s66
    %s69 = sphi 0, %s68
    %s83 = sphi 0, %s69
    %s87 = sphi 0, %s87
    %s89 = sphi 0, %s87
    %s90 = sphi 0, %s89
    %s104 = sphi 0, %s90
    %s108 = sphi 0, %s108
    %s110 = sphi 0, %s108
    %s111 = sphi 0, %s110
    %s125 = sphi 0, %s111
    %s129 = sphi 0, %s129
    %s131 = sphi 0, %s129
    %s132 = sphi 0, %s131
    %s146 = sphi 0, %s132
  $region4: #{atrous_block_forward.1} parent=0 // loop_header_branch
    %14 = sbr.rel (%p12) target = $region8
  $region5: #{atrous_block_forward.1} parent=0 // loop_body
    %s16 = ssub.s32 %s11, 1
    %s17 = ssub.s32 %s11, 2
    %s18 = sadd.s32 %s11, 1
    %s20 = sadd.s32 %s19, 1
    %p23 = scmp.eq.s32.totalorder %s11, 1
    %p24 = scmp.ne.s32.totalorder %s19, %s21
    %p25 = scmp.eq.s32.totalorder %s11, 0
    %p26 = por %p24, %p25
    %p27 = scmp.ne.s32.totalorder %s19, %s21
    %p28 = scmp.eq.s32.totalorder %s16, 1
    %p29 = por %p27, %p28
    %p30 = scmp.ne.s32.totalorder %s21, %s22
    %p31 = scmp.eq.s32.totalorder %s16, 0
    %p32 = por %p30, %p31
    %p33 = scmp.ne.s32.totalorder %s21, %s22
    %p34 = scmp.eq.s32.totalorder %s17, 1
    %p35 = por %p33, %p34
    %p37 = scmp.ne.s32.totalorder %s22, %s36
    %p38 = scmp.eq.s32.totalorder %s17, 0
    %p39 = por %p37, %p38
    %s40 = ssub.s32 %s11, %s18
    %p41 = scmp.eq.s32.totalorder %s40, 0
    %s43 = sadd.s32 %s42, 1
    %s44 = scalar_select %p41, %s42, %s43
    %p47 = pneg %p41
    %p48 = scmp.eq.s32.totalorder %s11, 1
    %p49 = por %p47, %p48
    %p50 = scmp.ne.s32.totalorder %s42, %s45
    %p51 = scmp.eq.s32.totalorder %s11, 0
    %p52 = por %p50, %p51
    %p53 = scmp.ne.s32.totalorder %s42, %s45
    %p54 = scmp.eq.s32.totalorder %s16, 1
    %p55 = por %p53, %p54
    %p56 = scmp.ne.s32.totalorder %s45, %s46
    %p57 = scmp.eq.s32.totalorder %s16, 0
    %p58 = por %p56, %p57
    %p59 = scmp.ne.s32.totalorder %s45, %s46
    %p60 = scmp.eq.s32.totalorder %s17, 1
    %p61 = por %p59, %p60
    %p63 = scmp.ne.s32.totalorder %s46, %s62
    %p64 = scmp.eq.s32.totalorder %s17, 0
    %p65 = por %p63, %p64
    %s67 = sadd.s32 %s66, 1
    %p70 = scmp.eq.s32.totalorder %s11, 1
    %p71 = scmp.ne.s32.totalorder %s66, %s68
    %p72 = scmp.eq.s32.totalorder %s11, 0
    %p73 = por %p71, %p72
    %p74 = scmp.ne.s32.totalorder %s66, %s68
    %p75 = scmp.eq.s32.totalorder %s16, 1
    %p76 = por %p74, %p75
    %p77 = scmp.ne.s32.totalorder %s68, %s69
    %p78 = scmp.eq.s32.totalorder %s16, 0
    %p79 = por %p77, %p78
    %p80 = scmp.ne.s32.totalorder %s68, %s69
    %p81 = scmp.eq.s32.totalorder %s17, 1
    %p82 = por %p80, %p81
    %p84 = scmp.ne.s32.totalorder %s69, %s83
    %p85 = scmp.eq.s32.totalorder %s17, 0
    %p86 = por %p84, %p85
    %s88 = sadd.s32 %s87, 1
    %p91 = scmp.eq.s32.totalorder %s11, 1
    %p92 = scmp.ne.s32.totalorder %s87, %s89
    %p93 = scmp.eq.s32.totalorder %s11, 0
    %p94 = por %p92, %p93
    %p95 = scmp.ne.s32.totalorder %s87, %s89
    %p96 = scmp.eq.s32.totalorder %s16, 1
    %p97 = por %p95, %p96
    %p98 = scmp.ne.s32.totalorder %s89, %s90
    %p99 = scmp.eq.s32.totalorder %s16, 0
    %p100 = por %p98, %p99
    %p101 = scmp.ne.s32.totalorder %s89, %s90
    %p102 = scmp.eq.s32.totalorder %s17, 1
    %p103 = por %p101, %p102
    %p105 = scmp.ne.s32.totalorder %s90, %s104
    %p106 = scmp.eq.s32.totalorder %s17, 0
    %p107 = por %p105, %p106
    %s109 = sadd.s32 %s108, 1
    %p112 = scmp.eq.s32.totalorder %s11, 1
    %p113 = scmp.ne.s32.totalorder %s108, %s110
    %p114 = scmp.eq.s32.totalorder %s11, 0
    %p115 = por %p113, %p114
    %p116 = scmp.ne.s32.totalorder %s108, %s110
    %p117 = scmp.eq.s32.totalorder %s16, 1
    %p118 = por %p116, %p117
    %p119 = scmp.ne.s32.totalorder %s110, %s111
    %p120 = scmp.eq.s32.totalorder %s16, 0
    %p121 = por %p119, %p120
    %p122 = scmp.ne.s32.totalorder %s110, %s111
    %p123 = scmp.eq.s32.totalorder %s17, 1
    %p124 = por %p122, %p123
    %p126 = scmp.ne.s32.totalorder %s111, %s125
    %p127 = scmp.eq.s32.totalorder %s17, 0
    %p128 = por %p126, %p127
    %s130 = sadd.s32 %s129, 1
    %p133 = scmp.eq.s32.totalorder %s11, 1
    %p134 = scmp.ne.s32.totalorder %s129, %s131
    %p135 = scmp.eq.s32.totalorder %s11, 0
    %p136 = por %p134, %p135
    %p137 = scmp.ne.s32.totalorder %s129, %s131
    %p138 = scmp.eq.s32.totalorder %s16, 1
    %p139 = por %p137, %p138
    %p140 = scmp.ne.s32.totalorder %s131, %s132
    %p141 = scmp.eq.s32.totalorder %s16, 0
    %p142 = por %p140, %p141
    %p143 = scmp.ne.s32.totalorder %s131, %s132
    %p144 = scmp.eq.s32.totalorder %s17, 1
    %p145 = por %p143, %p144
    %p147 = scmp.ne.s32.totalorder %s132, %s146
    %p148 = scmp.eq.s32.totalorder %s17, 0
    %p149 = por %p147, %p148
    %p150 = scmp.le.s32.totalorder 1, %s11
    %p151 = scmp.lt.s32.totalorder %s11, 3
    %p152 = pnand %p150, %p151
    %p153 = pneg %p152
    // Predicated region
    $region9: #{atrous_block_forward.1} parent=5 // pred_check
      _
    $region10: #{atrous_block_forward.1} parent=5 // pred_check_branch
      %155 = sbr.rel (%p152) target = $region12
    $region11: #{atrous_block_forward.1} parent=5 // pred_region
      %s156 = ssub.s32 %s11, 1
      // Predicated region
      $region13: #{atrous_block_forward.1} parent=11 // pred_check
        %p157 = pneg %p32
      $region14: #{atrous_block_forward.1} parent=11 // pred_check_branch
        %159 = sbr.rel (%p157) target = $region16
      $region15: #{atrous_block_forward.1} parent=11 // pred_region
        _
      $region16: #{atrous_block_forward.1} parent=11 // pred_fallthru
        _
      // Predicated region
      $region17: #{atrous_block_forward.1} parent=11 // pred_check
        %p160 = pneg %p79
      $region18: #{atrous_block_forward.1} parent=11 // pred_check_branch
        %162 = sbr.rel (%p160) target = $region20
      $region19: #{atrous_block_forward.1} parent=11 // pred_region
        _
      $region20: #{atrous_block_forward.1} parent=11 // pred_fallthru
        _
      // Predicated region
      $region21: #{atrous_block_forward.1} parent=11 // pred_check
        %p163 = pneg %p100
      $region22: #{atrous_block_forward.1} parent=11 // pred_check_branch
        %165 = sbr.rel (%p163) target = $region24
      $region23: #{atrous_block_forward.1} parent=11 // pred_region
        _
      $region24: #{atrous_block_forward.1} parent=11 // pred_fallthru
        _
      // Predicated region
      $region25: #{atrous_block_forward.1} parent=11 // pred_check
        %p166 = pneg %p121
      $region26: #{atrous_block_forward.1} parent=11 // pred_check_branch
        %168 = sbr.rel (%p166) target = $region28
      $region27: #{atrous_block_forward.1} parent=11 // pred_region
        _
      $region28: #{atrous_block_forward.1} parent=11 // pred_fallthru
        _
    $region12: #{atrous_block_forward.1} parent=5 // pred_fallthru
      _
    %p169 = scmp.lt.s32.totalorder %s11, 2
    // Predicated region
    $region29: #{atrous_block_forward.1} parent=5 // pred_check
      %p170 = pneg %p169
    $region30: #{atrous_block_forward.1} parent=5 // pred_check_branch
      %172 = sbr.rel (%p170) target = $region32
    $region31: #{atrous_block_forward.1} parent=5 // pred_region
      // Predicated region
      $region33: #{atrous_block_forward.1} parent=31 // pred_check
        %p173 = pneg %p52
      $region34: #{atrous_block_forward.1} parent=31 // pred_check_branch
        %175 = sbr.rel (%p173) target = $region36
      $region35: #{atrous_block_forward.1} parent=31 // pred_region
        %p176 = scmp.lt.s32.totalorder %s11, 1
        %s177 = scalar_select %p176, %s11, 1
        %s178 = smul.addr %s177, 4
        %s179 = smul.addr %s178, 2
        %s180 = scalar_lea.vmem %s1, %s179
      $region36: #{atrous_block_forward.1} parent=31 // pred_fallthru
        _
    $region32: #{atrous_block_forward.1} parent=5 // pred_fallthru
      _
    %p181 = scmp.le.s32.totalorder 1, %s11
    %p182 = scmp.lt.s32.totalorder %s11, 3
    %p183 = pnand %p181, %p182
    %p184 = pneg %p183
    // Predicated region
    $region37: #{atrous_block_forward.1} parent=5 // pred_check
      _
    $region38: #{atrous_block_forward.1} parent=5 // pred_check_branch
      %186 = sbr.rel (%p183) target = $region40
    $region39: #{atrous_block_forward.1} parent=5 // pred_region
      %s187 = ssub.s32 %s11, 1
      %p188 = pneg %p32
      %p189 = pneg %p29
      %p190 = scmp.lt.s32.totalorder %s16, 1
      %s191 = scalar_select %p190, %s16, 1
      %s192 = smul.addr %s191, 4
      %s193 = smul.addr %s192, 2
      %s194 = scalar_lea.vmem %s1, %s193
      %p195 = pneg %p58
      %p196 = pneg %p55
      %p197 = pneg %p79
      %p198 = pneg %p76
      %p199 = pneg %p100
      %p200 = pneg %p97
      %p201 = pneg %p121
      %p202 = pneg %p118
      %p203 = pneg %p142
      %p204 = pneg %p139
      %p205 = scmp.lt.s32.totalorder %s16, 1
      %s206 = scalar_select %p205, %s16, 1
      %s207 = smul.addr %s206, 4
      %s208 = smul.addr %s207, 2
      %s209 = scalar_lea.vmem %s1, %s208
      %p211 = scmp.eq.s32.totalorder %s16, 0
      // Predicated region
      $region41: #{atrous_block_forward.1} parent=39 // pred_check
        %p212 = pneg %p211
      $region42: #{atrous_block_forward.1} parent=39 // pred_check_branch
        %214 = sbr.rel (%p212) target = $region44
      $region43: #{atrous_block_forward.1} parent=39 // pred_region
        %215 = vst [vmem:[#allocation2] sm:$0xff] 0
        %vm216 = vcmask 519168
        %217 = vst.msk [vmem:[#allocation2 + $0x8] sm:$0xf] %vm216, 0
        %218 = vst [vmem:[#allocation2 + $0xc] sm:$0xff] 0
        %219 = vst.msk [vmem:[#allocation2 + $0x14] sm:$0xf] %vm216, 0
        %220 = vst [vmem:[#allocation2 + $0x18] sm:$0xff] 0
        %221 = vst.msk [vmem:[#allocation2 + $0x20] sm:$0xf] %vm216, 0
        %222 = vst [vmem:[#allocation2 + $0x24] sm:$0xff] 0
        %223 = vst.msk [vmem:[#allocation2 + $0x2c] sm:$0xf] %vm216, 0
        %224 = vst [vmem:[#allocation2 + $0x30] sm:$0xff] 0
        %225 = vst.msk [vmem:[#allocation2 + $0x38] sm:$0xf] %vm216, 0
        %226 = vst [vmem:[#allocation2 + $0x3c] sm:$0xff] 0
        %227 = vst.msk [vmem:[#allocation2 + $0x44] sm:$0xf] %vm216, 0
        %228 = vst [vmem:[#allocation2 + $0x48] sm:$0xff] 0
        %229 = vst.msk [vmem:[#allocation2 + $0x50] sm:$0xf] %vm216, 0
        %230 = vst [vmem:[#allocation2 + $0x54] sm:$0xff] 0
        %231 = vst.msk [vmem:[#allocation2 + $0x5c] sm:$0xf] %vm216, 0
        %232 = vst [vmem:[#allocation2 + $0x60] sm:$0xff] 0
        %233 = vst.msk [vmem:[#allocation2 + $0x68] sm:$0xf] %vm216, 0
        %vm234 = vcmask 7168
        %235 = vst.msk [vmem:[#allocation3] sm:$0xff] %vm234, 0.0
        %236 = vst.msk [vmem:[#allocation4] sm:$0xff] %vm234, 0.0
      $region44: #{atrous_block_forward.1} parent=39 // pred_fallthru
        _
      %v237 = vld [vmem:[%s209] sm:$0x3f]
      %v239 = vcombine.high %v237, %v237
      %v241 = vunpack.c.l.s4 1983009808
      %v242 = vunpack.c.0.s8 %v241
      %v243 = vlaneseq
      %v244 = vshrl.u32 %v243, 7
      %v245 = vsub.s32 %v242, %v244
      %v246 = vrot.slane %v237, %v245
      %v248 = vunpack.c.l.s4 1983009808
      %v249 = vunpack.c.0.s8 %v248
      %v250 = vlaneseq
      %v251 = vshrl.u32 %v250, 7
      %v252 = vsub.s32 %v249, %v251
      %v253 = vrot.slane %v239, %v252
      %256 = vst [vmem:[#allocation2] sm:$0x33] %v246
      %vm257 = vcmask 517120
      %258 = vst.msk [vmem:[#allocation2 + $0x8] sm:$0x3] %vm257, %v253
      %v259 = vld [vmem:[%s209] sm:$0x3f]
      %v261 = vcombine.high %v259, %v259
      %v263 = vunpack.c.l.s4 1983009808
      %v264 = vunpack.c.0.s8 %v263
      %v265 = vlaneseq
      %v266 = vshrl.u32 %v265, 7
      %v267 = vsub.s32 %v264, %v266
      %v268 = vrot.slane %v259, %v267
      %v270 = vunpack.c.l.s4 1983009808
      %v271 = vunpack.c.0.s8 %v270
      %v272 = vlaneseq
      %v273 = vshrl.u32 %v272, 7
      %v274 = vsub.s32 %v271, %v273
      %v275 = vrot.slane %v261, %v274
      %276 = vrot.lane.b32.xlu0 %v268, 126
      %v277 = vpop.permute.xlu0 %276
      %278 = vrot.lane.b32.xlu0 %v275, 126
      %v279 = vpop.permute.xlu0 %278
      %v280 = vrot.slane %v277, 4
      %v281 = vrot.slane %v279, 4
      %vm282 = vcmask 1043456
      %v283 = vsel %vm282, %v280, %v281
      %vm284 = vcmask 1031168
      %v285 = vsel %vm284, %v277, %v283
      %288 = vst [vmem:[#allocation2 + $0xc] sm:$0x33] %v285
      %289 = vst.msk [vmem:[#allocation2 + $0x14] sm:$0x3] %vm257, %v279
      %v290 = vld [vmem:[%s209] sm:$0x3f]
      %v292 = vcombine.high %v290, %v290
      %v294 = vunpack.c.l.s4 1983009808
      %v295 = vunpack.c.0.s8 %v294
      %v296 = vlaneseq
      %v297 = vshrl.u32 %v296, 7
      %v298 = vsub.s32 %v295, %v297
      %v299 = vrot.slane %v290, %v298
      %v301 = vunpack.c.l.s4 1983009808
      %v302 = vunpack.c.0.s8 %v301
      %v303 = vlaneseq
      %v304 = vshrl.u32 %v303, 7
      %v305 = vsub.s32 %v302, %v304
      %v306 = vrot.slane %v292, %v305
      %307 = vrot.lane.b32.xlu0 %v299, 124
      %v308 = vpop.permute.xlu0 %307
      %309 = vrot.lane.b32.xlu0 %v306, 124
      %v310 = vpop.permute.xlu0 %309
      %v311 = vrot.slane %v308, 4
      %v312 = vrot.slane %v310, 4
      %v313 = vsel %vm282, %v311, %v312
      %vm314 = vcmask 1014784
      %v315 = vsel %vm314, %v308, %v313
      %318 = vst [vmem:[#allocation2 + $0x18] sm:$0x33] %v315
      %319 = vst.msk [vmem:[#allocation2 + $0x20] sm:$0x3] %vm257, %v310
      %v320 = vld [vmem:[%s209] sm:$0x3f]
      %v322 = vcombine.high %v320, %v320
      %v324 = vunpack.c.l.s4 1983009808
      %v325 = vunpack.c.0.s8 %v324
      %v326 = vlaneseq
      %v327 = vshrl.u32 %v326, 7
      %v328 = vsub.s32 %v325, %v327
      %v329 = vrot.slane %v320, %v328
      %v331 = vunpack.c.l.s4 1983009808
      %v332 = vunpack.c.0.s8 %v331
      %v333 = vlaneseq
      %v334 = vshrl.u32 %v333, 7
      %v335 = vsub.s32 %v332, %v334
      %v336 = vrot.slane %v322, %v335
      %337 = vrot.lane.b32.xlu0 %v329, 88
      %v338 = vpop.permute.xlu0 %337
      %339 = vrot.lane.b32.xlu0 %v336, 88
      %v340 = vpop.permute.xlu0 %339
      %v341 = vrot.slane %v338, 4
      %v342 = vrot.slane %v340, 4
      %v343 = vsel %vm282, %v341, %v342
      %vm344 = vcmask 719872
      %v345 = vsel %vm344, %v338, %v343
      %348 = vst [vmem:[#allocation2 + $0x24] sm:$0x33] %v345
      %349 = vst.msk [vmem:[#allocation2 + $0x2c] sm:$0x3] %vm257, %v340
      %v350 = vld [vmem:[%s209] sm:$0x3f]
      %v352 = vcombine.high %v350, %v350
      %v354 = vunpack.c.l.s4 1983009808
      %v355 = vunpack.c.0.s8 %v354
      %v356 = vlaneseq
      %v357 = vshrl.u32 %v356, 7
      %v358 = vsub.s32 %v355, %v357
      %v359 = vrot.slane %v350, %v358
      %v361 = vunpack.c.l.s4 1983009808
      %v362 = vunpack.c.0.s8 %v361
      %v363 = vlaneseq
      %v364 = vshrl.u32 %v363, 7
      %v365 = vsub.s32 %v362, %v364
      %v366 = vrot.slane %v352, %v365
      %367 = vrot.lane.b32.xlu0 %v359, 86
      %v368 = vpop.permute.xlu0 %367
      %369 = vrot.lane.b32.xlu0 %v366, 86
      %v370 = vpop.permute.xlu0 %369
      %v371 = vrot.slane %v368, 4
      %v372 = vrot.slane %v370, 4
      %v373 = vsel %vm282, %v371, %v372
      %vm374 = vcmask 703488
      %v375 = vsel %vm374, %v368, %v373
      %378 = vst [vmem:[#allocation2 + $0x30] sm:$0x33] %v375
      %379 = vst.msk [vmem:[#allocation2 + $0x38] sm:$0x3] %vm257, %v370
      %v380 = vld [vmem:[%s209] sm:$0x3f]
      %v382 = vcombine.high %v380, %v380
      %v384 = vunpack.c.l.s4 1983009808
      %v385 = vunpack.c.0.s8 %v384
      %v386 = vlaneseq
      %v387 = vshrl.u32 %v386, 7
      %v388 = vsub.s32 %v385, %v387
      %v389 = vrot.slane %v380, %v388
      %v391 = vunpack.c.l.s4 1983009808
      %v392 = vunpack.c.0.s8 %v391
      %v393 = vlaneseq
      %v394 = vshrl.u32 %v393, 7
      %v395 = vsub.s32 %v392, %v394
      %v396 = vrot.slane %v382, %v395
      %397 = vrot.lane.b32.xlu0 %v389, 84
      %v398 = vpop.permute.xlu0 %397
      %399 = vrot.lane.b32.xlu0 %v396, 84
      %v400 = vpop.permute.xlu0 %399
      %v401 = vrot.slane %v398, 4
      %v402 = vrot.slane %v400, 4
      %v403 = vsel %vm282, %v401, %v402
      %vm404 = vcmask 687104
      %v405 = vsel %vm404, %v398, %v403
      %408 = vst [vmem:[#allocation2 + $0x3c] sm:$0x33] %v405
      %409 = vst.msk [vmem:[#allocation2 + $0x44] sm:$0x3] %vm257, %v400
      %v410 = vld [vmem:[%s209] sm:$0xff]
      %v412 = vcombine.high %v410, %v410
      %v414 = vunpack.c.l.s4 1983009808
      %v415 = vunpack.c.0.s8 %v414
      %v416 = vlaneseq
      %v417 = vshrl.u32 %v416, 7
      %v418 = vsub.s32 %v415, %v417
      %v419 = vrot.slane %v410, %v418
      %v421 = vunpack.c.l.s4 1983009808
      %v422 = vunpack.c.0.s8 %v421
      %v423 = vlaneseq
      %v424 = vshrl.u32 %v423, 7
      %v425 = vsub.s32 %v422, %v424
      %v426 = vrot.slane %v412, %v425
      %427 = vrot.lane.b32.xlu0 %v419, 48
      %v428 = vpop.permute.xlu0 %427
      %429 = vrot.lane.b32.xlu0 %v426, 48
      %v430 = vpop.permute.xlu0 %429
      %v431 = vrot.slane %v428, 4
      %v432 = vrot.slane %v430, 4
      %v433 = vsel %vm282, %v431, %v432
      %vm434 = vcmask 392192
      %v435 = vsel %vm434, %v428, %v433
      %v436 = vsel %vm434, %v430, %v432
      %439 = vst [vmem:[#allocation2 + $0x48] sm:$0x33] %v435
      %440 = vst.msk [vmem:[#allocation2 + $0x50] sm:$0x3] %vm257, %v436
      %v441 = vld [vmem:[%s209] sm:$0xff]
      %v443 = vcombine.high %v441, %v441
      %v445 = vunpack.c.l.s4 1983009808
      %v446 = vunpack.c.0.s8 %v445
      %v447 = vlaneseq
      %v448 = vshrl.u32 %v447, 7
      %v449 = vsub.s32 %v446, %v448
      %v450 = vrot.slane %v441, %v449
      %v452 = vunpack.c.l.s4 1983009808
      %v453 = vunpack.c.0.s8 %v452
      %v454 = vlaneseq
      %v455 = vshrl.u32 %v454, 7
      %v456 = vsub.s32 %v453, %v455
      %v457 = vrot.slane %v443, %v456
      %458 = vrot.lane.b32.xlu0 %v450, 46
      %v459 = vpop.permute.xlu0 %458
      %460 = vrot.lane.b32.xlu0 %v457, 46
      %v461 = vpop.permute.xlu0 %460
      %v462 = vrot.slane %v459, 4
      %v463 = vrot.slane %v461, 4
      %v464 = vsel %vm282, %v462, %v463
      %vm465 = vcmask 375808
      %v466 = vsel %vm465, %v459, %v464
      %v467 = vsel %vm465, %v461, %v463
      %470 = vst [vmem:[#allocation2 + $0x54] sm:$0x33] %v466
      %471 = vst.msk [vmem:[#allocation2 + $0x5c] sm:$0x3] %vm257, %v467
      %v472 = vld [vmem:[%s209] sm:$0xff]
      %v474 = vcombine.high %v472, %v472
      %v476 = vunpack.c.l.s4 1983009808
      %v477 = vunpack.c.0.s8 %v476
      %v478 = vlaneseq
      %v479 = vshrl.u32 %v478, 7
      %v480 = vsub.s32 %v477, %v479
      %v481 = vrot.slane %v472, %v480
      %v483 = vunpack.c.l.s4 1983009808
      %v484 = vunpack.c.0.s8 %v483
      %v485 = vlaneseq
      %v486 = vshrl.u32 %v485, 7
      %v487 = vsub.s32 %v484, %v486
      %v488 = vrot.slane %v474, %v487
      %489 = vrot.lane.b32.xlu0 %v481, 44
      %v490 = vpop.permute.xlu0 %489
      %491 = vrot.lane.b32.xlu0 %v488, 44
      %v492 = vpop.permute.xlu0 %491
      %v493 = vrot.slane %v490, 4
      %v494 = vrot.slane %v492, 4
      %v495 = vsel %vm282, %v493, %v494
      %vm496 = vcmask 359424
      %v497 = vsel %vm496, %v490, %v495
      %v498 = vsel %vm496, %v492, %v494
      %501 = vst [vmem:[#allocation2 + $0x60] sm:$0x33] %v497
      %502 = vst.msk [vmem:[#allocation2 + $0x68] sm:$0x3] %vm257, %v498
      %v503 = vld [vmem:[%s2] sm:$0xf]
      %v504 = vld [vmem:[#allocation2] sm:$0xff]
      %v505 = vld [vmem:[#allocation2 + $0x8] sm:$0xf]
      %v506 = vld [vmem:[#allocation2 + $0xc] sm:$0xff]
      %v507 = vld [vmem:[#allocation2 + $0x14] sm:$0xf]
      %v508 = vld [vmem:[#allocation2 + $0x18] sm:$0xff]
      %v509 = vld [vmem:[#allocation2 + $0x20] sm:$0xf]
      %v510 = vld [vmem:[#allocation2 + $0x24] sm:$0xff]
      %v511 = vld [vmem:[#allocation2 + $0x2c] sm:$0xf]
      %v512 = vld [vmem:[#allocation2 + $0x30] sm:$0xff]
      %v513 = vld [vmem:[#allocation2 + $0x38] sm:$0xf]
      %v514 = vld [vmem:[#allocation2 + $0x3c] sm:$0xff]
      %v515 = vld [vmem:[#allocation2 + $0x44] sm:$0xf]
      %v516 = vld [vmem:[#allocation2 + $0x48] sm:$0xff]
      %v517 = vld [vmem:[#allocation2 + $0x50] sm:$0xf]
      %v518 = vld [vmem:[#allocation2 + $0x54] sm:$0xff]
      %v519 = vld [vmem:[#allocation2 + $0x5c] sm:$0xf]
      %v520 = vld [vmem:[#allocation2 + $0x60] sm:$0xff]
      %v521 = vld [vmem:[#allocation2 + $0x68] sm:$0xf]
      %v540 = vunpack.c.l.b16 %v504
      %v541 = vunpack.c.h.b16 %v504
      %v542 = vunpack.c.l.b16 %v505
      %v543 = vunpack.c.l.b16 %v506
      %v544 = vunpack.c.h.b16 %v506
      %v545 = vunpack.c.l.b16 %v507
      %v546 = vunpack.c.l.b16 %v508
      %v547 = vunpack.c.h.b16 %v508
      %v548 = vunpack.c.l.b16 %v509
      %v549 = vunpack.c.l.b16 %v510
      %v550 = vunpack.c.h.b16 %v510
      %v551 = vunpack.c.l.b16 %v511
      %v552 = vunpack.c.l.b16 %v512
      %v553 = vunpack.c.h.b16 %v512
      %v554 = vunpack.c.l.b16 %v513
      %v555 = vunpack.c.l.b16 %v514
      %v556 = vunpack.c.h.b16 %v514
      %v557 = vunpack.c.l.b16 %v515
      %v558 = vunpack.c.l.b16 %v516
      %v559 = vunpack.c.h.b16 %v516
      %v560 = vunpack.c.l.b16 %v517
      %v561 = vunpack.c.l.b16 %v518
      %v562 = vunpack.c.h.b16 %v518
      %v563 = vunpack.c.l.b16 %v519
      %v564 = vunpack.c.l.b16 %v520
      %v565 = vunpack.c.h.b16 %v520
      %v566 = vunpack.c.l.b16 %v521
      %v567 = vpack.c.b16 %v543, %v540
      %v568 = vpack.c.b16 %v544, %v541
      %v569 = vpack.c.b16 %v545, %v542
      %v570 = vpack.c.b16 %v549, %v546
      %v571 = vpack.c.b16 %v550, %v547
      %v572 = vpack.c.b16 %v551, %v548
      %v573 = vpack.c.b16 %v555, %v552
      %v574 = vpack.c.b16 %v556, %v553
      %v575 = vpack.c.b16 %v557, %v554
      %v576 = vpack.c.b16 %v561, %v558
      %v577 = vpack.c.b16 %v562, %v559
      %v578 = vpack.c.b16 %v563, %v560
      %v579 = vpack.c.b16 %v564, %v564
      %v580 = vpack.c.b16 %v565, %v565
      %v581 = vpack.c.b16 %v566, %v566
      %vm594 = vcmask 588800
      %v596 = vsel %vm594, %v503, 0
      %vm598 = vcmask 1043456
      %v600 = vsel %vm598, %v579, 0
      %v603 = vsel %vm598, %v580, 0
      %v606 = vsel %vm598, %v581, 0
      %608 = vmatprep.subr.bf16.mxu0 %v568
      %609 = vmatpush1.bf16.msra.mxu0 %v567
      %610 = vmatprep.subr.bf16.mxu0 %v571
      %611 = vmatpush1.bf16.msra.mxu0 %v570
      %612 = vmatprep.subr.bf16.mxu0 %v574
      %613 = vmatpush1.bf16.msra.mxu0 %v573
      %614 = vmatprep.subr.bf16.mxu0 %v577
      %615 = vmatpush1.bf16.msra.mxu0 %v576
      %616 = vmatprep.subr.bf16.mxu0 %v603
      %617 = vmatpush1.bf16.msra.mxu0 %v600
      %618 = vmatprep.subr.bf16.mxu0 0
      %619 = vmatpush1.bf16.msra.mxu0 0
      %620 = vmatprep.subr.bf16.mxu0 0
      %621 = vmatpush1.bf16.msra.mxu0 0
      %622 = vmatprep.subr.bf16.mxu0 0
      %623 = vmatpush1.bf16.msra.mxu0 0
      %624 = vmatprep.subr.bf16.mxu0 0
      %625 = vmatpush1.bf16.msra.mxu0 0
      %626 = vmatprep.subr.bf16.mxu0 0
      %627 = vmatpush1.bf16.msra.mxu0 0
      %628 = vmatprep.subr.bf16.mxu0 0
      %629 = vmatpush1.bf16.msra.mxu0 0
      %630 = vmatprep.subr.bf16.mxu0 0
      %631 = vmatpush1.bf16.msra.mxu0 0
      %632 = vmatprep.subr.bf16.mxu0 0
      %633 = vmatpush1.bf16.msra.mxu0 0
      %634 = vmatprep.subr.bf16.mxu0 0
      %635 = vmatpush1.bf16.msra.mxu0 0
      %636 = vmatprep.subr.bf16.mxu0 0
      %637 = vmatpush1.bf16.msra.mxu0 0
      %638 = vmatprep.subr.bf16.mxu0 0
      %639 = vmatpush1.bf16.msra.mxu0 0
      %640 = vmatprep.mubr.bf16.mxu0 0
      %641 = vmatmul.mubr.bf16.gmra.mrb[0].mxu0 %v596
      %v642 = vpop.f32.mrb[0].mxu0
      %v643 = vadd.f32 0.0, %v642
      %v644 = vpop.f32.mrb[0].mxu0
      %v645 = vadd.f32 0.0, %v644
      %v646 = vpop.f32.mrb[0].mxu0
      %v647 = vpop.f32.mrb[0].mxu0
      %648 = vdwg.mxu0
      %649 = vmatprep.subr.bf16.mxu0 0
      %650 = vmatpush1.bf16.msra.mxu0 %v569
      %651 = vmatprep.subr.bf16.mxu0 0
      %652 = vmatpush1.bf16.msra.mxu0 %v572
      %653 = vmatprep.subr.bf16.mxu0 0
      %654 = vmatpush1.bf16.msra.mxu0 %v575
      %655 = vmatprep.subr.bf16.mxu0 0
      %656 = vmatpush1.bf16.msra.mxu0 %v578
      %657 = vmatprep.subr.bf16.mxu0 0
      %658 = vmatpush1.bf16.msra.mxu0 %v606
      %659 = vmatprep.subr.bf16.mxu0 0
      %660 = vmatpush1.bf16.msra.mxu0 0
      %661 = vmatprep.subr.bf16.mxu0 0
      %662 = vmatpush1.bf16.msra.mxu0 0
      %663 = vmatprep.subr.bf16.mxu0 0
      %664 = vmatpush1.bf16.msra.mxu0 0
      %665 = vmatprep.subr.bf16.mxu0 0
      %666 = vmatpush1.bf16.msra.mxu0 0
      %667 = vmatprep.subr.bf16.mxu0 0
      %668 = vmatpush1.bf16.msra.mxu0 0
      %669 = vmatprep.subr.bf16.mxu0 0
      %670 = vmatpush1.bf16.msra.mxu0 0
      %671 = vmatprep.subr.bf16.mxu0 0
      %672 = vmatpush1.bf16.msra.mxu0 0
      %673 = vmatprep.subr.bf16.mxu0 0
      %674 = vmatpush1.bf16.msra.mxu0 0
      %675 = vmatprep.subr.bf16.mxu0 0
      %676 = vmatpush1.bf16.msra.mxu0 0
      %677 = vmatprep.subr.bf16.mxu0 0
      %678 = vmatpush1.bf16.msra.mxu0 0
      %679 = vmatprep.subr.bf16.mxu0 0
      %680 = vmatpush1.bf16.msra.mxu0 0
      %681 = vmatprep.mubr.bf16.mxu0 0
      %682 = vmatmul.mubr.bf16.gmra.mrb[0].mxu0 %v596
      %v683 = vpop.f32.mrb[0].mxu0
      %v684 = vadd.f32 0.0, %v683
      %v685 = vpop.f32.mrb[0].mxu0
      %v686 = vpop.f32.mrb[0].mxu0
      %v687 = vpop.f32.mrb[0].mxu0
      %688 = vdwg.mxu0
      %s689 = smul.u32 %s16, 3
      %s690 = smul.addr %s689, 8
      %s691 = scalar_lea.vmem %s5, %s690
      %692 = vst [vmem:[%s691] sm:$0xff] %v643
      %693 = vst [vmem:[%s691 + $0x8] sm:$0xff] %v645
      %vm694 = vcmask 523264
      %695 = vst.msk [vmem:[%s691 + $0x10] sm:$0xff] %vm694, %v684
      %v696 = vld [vmem:[%s0] sm:$0x7]
      %v698 = vlaneseq
      %v699 = vshrl.u32 %v698, 7
      %v700 = vsub.s32 0, %v699
      %v701 = vrot.slane %v696, %v700
      %v702 = vlaneseq
      %v703 = vshrl.u32 %v702, 7
      %v704 = vsub.s32 1, %v703
      %v705 = vrot.slane %v696, %v704
      %v706 = vlaneseq
      %v707 = vshrl.u32 %v706, 7
      %v708 = vsub.s32 2, %v707
      %v709 = vrot.slane %v696, %v708
      %v713 = vmul.f32 %v643, %v701
      %v714 = vmul.f32 %v645, %v705
      %v715 = vmul.f32 %v684, %v709
      %v716 = vld [vmem:[#allocation3] sm:$0xff]
      %v717 = vadd.f32 %v713, %v714
      %v718 = vsel %vm694, %v715, 0.0
      %v719 = vadd.f32 %v717, %v718
      %720 = vadd.xlane.f32.xlu0 %v719
      %v721 = vpop.xlane.xlu0 %720
      %v722 = vadd.f32 %v716, %v721
      %vm723 = vcmask 7168
      %724 = vst.msk [vmem:[#allocation3] sm:$0xff] %vm723, %v722
      %v725 = vld [vmem:[#allocation4] sm:$0xff]
      %v726 = vmul.f32 %v713, %v643
      %v727 = vmul.f32 %v714, %v645
      %v728 = vmul.f32 %v715, %v684
      %v729 = vadd.f32 %v726, %v727
      %v730 = vsel %vm694, %v728, 0.0
      %v731 = vadd.f32 %v729, %v730
      %732 = vadd.xlane.f32.xlu0 %v731
      %v733 = vpop.xlane.xlu0 %732
      %v734 = vadd.f32 %v725, %v733
      %735 = vst.msk [vmem:[#allocation4] sm:$0xff] %vm723, %v734
      %p736 = scmp.eq.s32.totalorder %s16, 1
      // Predicated region
      $region45: #{atrous_block_forward.1} parent=39 // pred_check
        %p737 = pneg %p736
      $region46: #{atrous_block_forward.1} parent=39 // pred_check_branch
        %739 = sbr.rel (%p737) target = $region48
      $region47: #{atrous_block_forward.1} parent=39 // pred_region
        %v740 = vld [vmem:[#allocation3] sm:$0xff]
        %v741 = vmul.f32 %v740, 0.001953125
        %v742 = vld [vmem:[#allocation4] sm:$0xff]
        %v743 = vmul.f32 %v742, 0.001953125
        %v744 = vmul.f32 %v741, %v741
        %v745 = vsub.f32 %v743, %v744
        %v746 = vmax.f32 %v745, 0.0
        %v747 = vadd.f32 %v746, 1e-05
        %v748 = vrsqrt.pop %v747
        %v749 = vld [vmem:[%s3] sm:$0xff]
        %v750 = vmul.f32 %v749, %v748
        %v751 = vld [vmem:[%s4] sm:$0xff]
        %v752 = vmul.f32 %v741, %v750
        %v753 = vsub.f32 %v751, %v752
        %v754 = vld [vmem:[%s5] sm:$0xff]
        %v755 = vld [vmem:[%s5 + $0x8] sm:$0xff]
        %v756 = vld [vmem:[%s5 + $0x10] sm:$0xff]
        %v757 = vld [vmem:[%s5 + $0x18] sm:$0xff]
        %v758 = vld [vmem:[%s5 + $0x20] sm:$0xff]
        %v759 = vld [vmem:[%s5 + $0x28] sm:$0xff]
        %761 = vset.pattern.permute.xlu0 0
        %762 = vperm.xlu0 %761, %v750
        %v763 = vpop.permute.xlu0 %762
        %v765 = vmul.f32 %v754, %v763
        %v766 = vmul.f32 %v755, %v763
        %v767 = vmul.f32 %v756, %v763
        %v768 = vmul.f32 %v757, %v763
        %v769 = vmul.f32 %v758, %v763
        %v770 = vmul.f32 %v759, %v763
        %772 = vset.pattern.permute.xlu0 0
        %773 = vperm.xlu0 %772, %v753
        %v774 = vpop.permute.xlu0 %773
        %v776 = vadd.f32 %v765, %v774
        %v777 = vadd.f32 %v766, %v774
        %v778 = vadd.f32 %v767, %v774
        %v779 = vadd.f32 %v768, %v774
        %v780 = vadd.f32 %v769, %v774
        %v781 = vadd.f32 %v770, %v774
        %v782 = vmax.f32 %v776, 0.0
        %v783 = vmax.f32 %v777, 0.0
        %v784 = vmax.f32 %v778, 0.0
        %v785 = vmax.f32 %v779, 0.0
        %v786 = vmax.f32 %v780, 0.0
        %v787 = vmax.f32 %v781, 0.0
        %788 = vst [vmem:[%s5] sm:$0xff] %v782
        %789 = vst [vmem:[%s5 + $0x8] sm:$0xff] %v783
        %790 = vst.msk [vmem:[%s5 + $0x10] sm:$0xff] %vm694, %v784
        %791 = vst [vmem:[%s5 + $0x18] sm:$0xff] %v785
        %792 = vst [vmem:[%s5 + $0x20] sm:$0xff] %v786
        %793 = vst.msk [vmem:[%s5 + $0x28] sm:$0xff] %vm694, %v787
      $region48: #{atrous_block_forward.1} parent=39 // pred_fallthru
        _
      // Predicated region
      $region49: #{atrous_block_forward.1} parent=39 // pred_check
        %p794 = pneg %p139
      $region50: #{atrous_block_forward.1} parent=39 // pred_check_branch
        %796 = sbr.rel (%p794) target = $region52
      $region51: #{atrous_block_forward.1} parent=39 // pred_region
        _
      $region52: #{atrous_block_forward.1} parent=39 // pred_fallthru
        _
      // Predicated region
      $region53: #{atrous_block_forward.1} parent=39 // pred_check
        %p797 = pneg %p139
      $region54: #{atrous_block_forward.1} parent=39 // pred_check_branch
        %799 = sbr.rel (%p797) target = $region56
      $region55: #{atrous_block_forward.1} parent=39 // pred_region
        _
      $region56: #{atrous_block_forward.1} parent=39 // pred_fallthru
        _
    $region40: #{atrous_block_forward.1} parent=5 // pred_fallthru
      _
    %p800 = scmp.le.s32.totalorder 2, %s11
    // Predicated region
    $region57: #{atrous_block_forward.1} parent=5 // pred_check
      %p801 = pneg %p800
    $region58: #{atrous_block_forward.1} parent=5 // pred_check_branch
      %803 = sbr.rel (%p801) target = $region60
    $region59: #{atrous_block_forward.1} parent=5 // pred_region
      %s804 = ssub.s32 %s11, 2
    $region60: #{atrous_block_forward.1} parent=5 // pred_fallthru
      _
  $region6: #{atrous_block_forward.1} parent=0 // loop_footer
    %s15 = sadd.s32 1, %s11
  $region7: #{atrous_block_forward.1} parent=0 // loop_footer_branch
    %10 = sbr.rel target = $region3
  $region8: #{atrous_block_forward.1} parent=0 // loop_exit
    _

</llo_original>
